<compile_context>
chip_gen: v6e
topology: v6e:2x2x1
jax: 0.10.0
libtpu: 0.0.40
codegen_flags: <defaults>
</compile_context>

<pallas_src>
import functools

import jax
import jax.numpy as jnp
from jax import lax
from jax.experimental import pallas as pl
from jax.experimental.pallas import tpu as pltpu


def _e2e_kernel(x_ref, w1_ref, w2_ref, o_ref, b_sc, *, C, H, W, P, TH):
    """One grid step = (one sample n, one H-tile hi).

    x_ref : (C*H, W)   whole sample, natural NCHW layout flattened over (c, h)
    w1_ref: (P, C*W)   Conv2d (1, d)        weights, flattened over (c, kw)
    w2_ref: (P, C*H)   Conv2d (node_num, 1) weights, flattened over (c, kh)
    o_ref : (P, TH*W)  lane-dense output slab for rows [hi*TH, hi*TH + TH)
    b_sc  : (P, W) f32 scratch — row-conv result, reused across the H tiles
    """
    hi = pl.program_id(1)

    # ---- b[p, w] = sum_{c,kh} W2[p,c,kh] * x[c,kh,w]  (once per sample) ----
    # Single MXU matmul over the full (c, kh) contraction axis; kept in f32
    # scratch across the inner ("arbitrary") H-tile axis.
    @pl.when(hi == 0)
    def _():
        b_sc[...] = jnp.dot(w2_ref[...], x_ref[...],
                            preferred_element_type=jnp.float32)

    # ---- a[p, h] = sum_{c,kw} W1[p,c,kw] * x[c,h,kw]  for this H tile ------
    # C (= in_planes) is architecturally small and static, so a static Python
    # loop of NT matmuls (both operands contracted on their minor axis) avoids
    # any in-kernel transpose/relayout of x while accumulating in f32.
    row0 = pl.multiple_of(hi * TH, TH)
    a_t = jnp.zeros((P, TH), jnp.float32)
    for c in range(C):
        x_c = x_ref[pl.ds(row0 + c * H, TH), :]        # (TH, W) rows of channel c
        w1_c = w1_ref[:, c * W:(c + 1) * W]            # (P,  W)
        a_t = a_t + lax.dot_general(
            w1_c, x_c, (((1,), (1,)), ((), ())),       # contract minor dims (NT)
            preferred_element_type=jnp.float32)

    # ---- lane-dense slab: out[p, h*W + w] = a[p, h] + b[p, w] ---------------
    # One broadcast-add + one reshape per BLOCK (not per sample).
    out = a_t[:, :, None] + b_sc[...][:, None, :]       # (P, TH, W) f32
    o_ref[...] = out.reshape(P, TH * W).astype(o_ref.dtype)


def _vmem_block_bytes(C, H, W, P, TH, in_bytes, out_bytes):
    """Rough per-core VMEM working set for the chosen tiling."""
    x_blk = 2 * C * H * W * in_bytes          # full-sample x block, double-buffered
    weights = P * C * (W + H) * in_bytes      # single-buffered (pl.Buffered(1))
    b_scratch = P * W * 4                     # f32 scratch
    out_blk = 2 * P * TH * W * out_bytes      # output slab, double-buffered
    temps = 2 * P * TH * W * 4                # f32 broadcast-add temp + relayout copy
    return x_blk + weights + b_scratch + out_blk + temps


def _pick_h_tile(C, H, W, P, in_bytes, out_bytes, budget_bytes):
    """Largest H tile (divisor of H, lane-aligned output block) fitting the budget."""
    cands = [t for t in range(H, 0, -1)
             if H % t == 0 and (t == H or (t * W) % 128 == 0)]
    for t in cands:
        if _vmem_block_bytes(C, H, W, P, t, in_bytes, out_bytes) <= budget_bytes:
            return t
    return cands[-1]


def e2e_block(x, w1, w2, *, h_tile=None, compute_dtype=None,
              vmem_budget_bytes=24 * 2**20):
    """x: (N, C, H, W); w1: (P, C, 1, W); w2: (P, C, H, 1) -> (N, P, H, W)."""
    N, C, H, W = x.shape
    P = w1.shape[0]
    assert w1.shape == (P, C, 1, W), w1.shape
    assert w2.shape == (P, C, H, 1), w2.shape

    out_dtype = x.dtype
    cdt = jnp.dtype(compute_dtype) if compute_dtype is not None else jnp.dtype(x.dtype)
    in_bytes = cdt.itemsize
    out_bytes = jnp.dtype(out_dtype).itemsize

    # ---- wrapper-side layout plumbing (x keeps its natural layout) ----------
    xf = x.reshape(N, C * H, W).astype(cdt)        # free flatten of (c, h)
    w1f = w1.reshape(P, C * W).astype(cdt)         # (p, c, 0, kw) -> (p, c*W + kw)
    w2f = w2.reshape(P, C * H).astype(cdt)         # (p, c, kh, 0) -> (p, c*H + kh)

    TH = h_tile if h_tile is not None else _pick_h_tile(
        C, H, W, P, in_bytes, out_bytes, vmem_budget_bytes)
    assert H % TH == 0, (H, TH)
    NH = H // TH

    est = _vmem_block_bytes(C, H, W, P, TH, in_bytes, out_bytes)
    vmem_limit = int(min(max(32 * 2**20, 2 * est), 64 * 2**20))

    flops = int(4 * N * P * C * H * W + N * P * H * W)
    bytes_accessed = int((xf.size + w1f.size + w2f.size) * in_bytes
                         + N * P * H * W * out_bytes)

    kernel = functools.partial(_e2e_kernel, C=C, H=H, W=W, P=P, TH=TH)

    out_flat = pl.pallas_call(
        kernel,
        out_shape=jax.ShapeDtypeStruct((N, P, H * W), out_dtype),
        grid_spec=pltpu.PrefetchScalarGridSpec(
            num_scalar_prefetch=0,
            grid=(N, NH),
            in_specs=[
                # whole sample, fetched from HBM once per n (index constant in hi)
                pl.BlockSpec((None, C * H, W), lambda n, hi: (n, 0, 0)),
                # weights: constant index -> single-buffer to save VMEM
                pl.BlockSpec((P, C * W), lambda n, hi: (0, 0),
                             pipeline_mode=pl.Buffered(1)),
                pl.BlockSpec((P, C * H), lambda n, hi: (0, 0),
                             pipeline_mode=pl.Buffered(1)),
            ],
            out_specs=pl.BlockSpec((None, P, TH * W), lambda n, hi: (n, 0, hi)),
            scratch_shapes=[pltpu.VMEM((P, W), jnp.float32)],
        ),
        compiler_params=pltpu.CompilerParams(
            dimension_semantics=("parallel", "arbitrary"),
            vmem_limit_bytes=vmem_limit),
        cost_estimate=pl.CostEstimate(
            flops=flops, transcendentals=0, bytes_accessed=bytes_accessed),
    )(xf, w1f, w2f)

    # Free contiguous view back to NCHW.
    return out_flat.reshape(N, P, H, W)


def e2e_block_ref(x, w1, w2):
    """Pure-JAX reference (matches the PyTorch forward)."""
    a = jnp.einsum("nchw,pcw->nph", x, w1[:, :, 0, :])     # (N, P, H)
    b = jnp.einsum("nchw,pch->npw", x, w2[:, :, :, 0])     # (N, P, W)
    return a[:, :, :, None] + b[:, :, None, :]


if __name__ == "__main__":
    # Small shapes consistent with E2EBlock(in_planes=4, planes=8, node_num=16, d=16)
    N, C, P, node_num, d = 2, 4, 8, 16, 16
    H, W = node_num, d

    key = jax.random.PRNGKey(0)
    kx, k1, k2 = jax.random.split(key, 3)

    x = jax.random.normal(kx, (N, C, H, W), dtype=jnp.float32)

    # PyTorch Conv2d default init: U(-1/sqrt(fan_in), +1/sqrt(fan_in))
    fan1 = C * 1 * d
    fan2 = C * node_num * 1
    w1 = jax.random.uniform(k1, (P, C, 1, d), dtype=jnp.float32,
                            minval=-1.0 / jnp.sqrt(fan1), maxval=1.0 / jnp.sqrt(fan1))
    w2 = jax.random.uniform(k2, (P, C, node_num, 1), dtype=jnp.float32,
                            minval=-1.0 / jnp.sqrt(fan2), maxval=1.0 / jnp.sqrt(fan2))

    ref = e2e_block_ref(x, w1, w2)

    # Default tiling (single H tile at this toy size).
    out = jax.block_until_ready(e2e_block(x, w1, w2))
    assert out.shape == (N, P, H, W), out.shape
    assert jnp.allclose(out, ref, atol=2e-3, rtol=2e-3), \
        float(jnp.max(jnp.abs(out - ref)))

    # Exercise the H-tiled path (grid=(N, 2), b kept in scratch across tiles).
    out_tiled = jax.block_until_ready(e2e_block(x, w1, w2, h_tile=8))
    assert jnp.allclose(out_tiled, ref, atol=2e-3, rtol=2e-3), \
        float(jnp.max(jnp.abs(out_tiled - ref)))

    print("KERNEL_OK")
</pallas_src>

<mosaic_0001>
module attributes {stable_mosaic.version = 11 : i64} {
  func.func @_e2e_kernel(%arg0: i32, %arg1: i32, %arg2: memref<1x64x16xf32, #tpu.memory_space<vmem>>, %arg3: memref<8x64xf32, #tpu.memory_space<vmem>>, %arg4: memref<8x64xf32, #tpu.memory_space<vmem>>, %arg5: memref<1x8x256xf32, #tpu.memory_space<vmem>>, %arg6: memref<8x16xf32, #tpu.memory_space<vmem>>) attributes {dimension_semantics = [#tpu.dimension_semantics<parallel>, #tpu.dimension_semantics<arbitrary>], iteration_bounds = array<i64: 2, 1>, scalar_prefetch = 0 : i64, scratch_operands = 1 : i64, tpu.core_type = #tpu.core_type<tc>, window_params = [{transform_indices = @transform_0, window_bounds = array<i64: 1, 64, 16>}, {pipeline_mode = #tpu.pipeline_mode<synchronous>, transform_indices = @transform_1, window_bounds = array<i64: 8, 64>}, {pipeline_mode = #tpu.pipeline_mode<synchronous>, transform_indices = @transform_2, window_bounds = array<i64: 8, 64>}, {transform_indices = @transform_3, window_bounds = array<i64: 1, 8, 256>}]} {
    %c0_i32 = arith.constant 0 : i32
    %0 = arith.cmpi eq, %arg1, %c0_i32 : i32
    %1 = arith.extui %0 : i1 to i32
    %c0_i32_0 = arith.constant 0 : i32
    %2 = arith.cmpi ne, %1, %c0_i32_0 : i32
    scf.if %2 {
      %c0_24 = arith.constant 0 : index
      %c0_25 = arith.constant 0 : index
      %44 = vector.load %arg4[%c0_24, %c0_25] : memref<8x64xf32, #tpu.memory_space<vmem>>, vector<8x64xf32>
      %c0_26 = arith.constant 0 : index
      %c0_27 = arith.constant 0 : index
      %c0_28 = arith.constant 0 : index
      %45 = vector.load %arg2[%c0_26, %c0_27, %c0_28] : memref<1x64x16xf32, #tpu.memory_space<vmem>>, vector<1x64x16xf32>
      %46 = vector.shape_cast %45 : vector<1x64x16xf32> to vector<64x16xf32>
      %cst_29 = arith.constant dense<0.000000e+00> : vector<8x16xf32>
      %47 = tpu.matmul %44, %46, %cst_29 {dimension_numbers = #tpu.dot_dimension_numbers<[1], [0], [0], [1], [0, 0, 1, 1], [], []>} : vector<8x64xf32>, vector<64x16xf32>, vector<8x16xf32> -> vector<8x16xf32>
      %c0_30 = arith.constant 0 : index
      %c0_31 = arith.constant 0 : index
      %48 = vector.load %arg6[%c0_30, %c0_31] : memref<8x16xf32, #tpu.memory_space<vmem>>, vector<8x16xf32>
      tpu.vector_store %arg6[%c0_30, %c0_31], %47 {strides = array<i32>} : memref<8x16xf32, #tpu.memory_space<vmem>>, vector<8x16xf32>,
    } else {
    }
    %c16_i32 = arith.constant 16 : i32
    %3 = arith.muli %arg1, %c16_i32 : i32
    %4 = tpu.assume_multiple %3, 16 : i32
    %cst = arith.constant 0.000000e+00 : f32
    %5 = vector.broadcast %cst : f32 to vector<8x16xf32>
    %c0_i32_1 = arith.constant 0 : i32
    %6 = arith.addi %4, %c0_i32_1 : i32
    %c0 = arith.constant 0 : index
    %7 = arith.index_cast %6 : i32 to index
    %c0_2 = arith.constant 0 : index
    %8 = vector.load %arg2[%c0, %7, %c0_2] : memref<1x64x16xf32, #tpu.memory_space<vmem>>, vector<1x16x16xf32>
    %9 = vector.shape_cast %8 : vector<1x16x16xf32> to vector<16x16xf32>
    %c0_3 = arith.constant 0 : index
    %c0_4 = arith.constant 0 : index
    %10 = vector.load %arg3[%c0_3, %c0_4] : memref<8x64xf32, #tpu.memory_space<vmem>>, vector<8x16xf32>
    %cst_5 = arith.constant dense<0.000000e+00> : vector<8x16xf32>
    %11 = tpu.matmul %10, %9, %cst_5 {dimension_numbers = #tpu.dot_dimension_numbers<[1], [1], [0], [0], [0, 0, 1, 0], [], []>} : vector<8x16xf32>, vector<16x16xf32>, vector<8x16xf32> -> vector<8x16xf32>
    %12 = arith.addf %5, %11 : vector<8x16xf32>
    %c16_i32_6 = arith.constant 16 : i32
    %13 = arith.addi %4, %c16_i32_6 : i32
    %c0_7 = arith.constant 0 : index
    %14 = arith.index_cast %13 : i32 to index
    %c0_8 = arith.constant 0 : index
    %15 = vector.load %arg2[%c0_7, %14, %c0_8] : memref<1x64x16xf32, #tpu.memory_space<vmem>>, vector<1x16x16xf32>
    %16 = vector.shape_cast %15 : vector<1x16x16xf32> to vector<16x16xf32>
    %c0_9 = arith.constant 0 : index
    %c16 = arith.constant 16 : index
    %17 = vector.load %arg3[%c0_9, %c16] : memref<8x64xf32, #tpu.memory_space<vmem>>, vector<8x16xf32>
    %cst_10 = arith.constant dense<0.000000e+00> : vector<8x16xf32>
    %18 = tpu.matmul %17, %16, %cst_10 {dimension_numbers = #tpu.dot_dimension_numbers<[1], [1], [0], [0], [0, 0, 1, 0], [], []>} : vector<8x16xf32>, vector<16x16xf32>, vector<8x16xf32> -> vector<8x16xf32>
    %19 = arith.addf %12, %18 : vector<8x16xf32>
    %c32_i32 = arith.constant 32 : i32
    %20 = arith.addi %4, %c32_i32 : i32
    %c0_11 = arith.constant 0 : index
    %21 = arith.index_cast %20 : i32 to index
    %c0_12 = arith.constant 0 : index
    %22 = vector.load %arg2[%c0_11, %21, %c0_12] : memref<1x64x16xf32, #tpu.memory_space<vmem>>, vector<1x16x16xf32>
    %23 = vector.shape_cast %22 : vector<1x16x16xf32> to vector<16x16xf32>
    %c0_13 = arith.constant 0 : index
    %c32 = arith.constant 32 : index
    %24 = vector.load %arg3[%c0_13, %c32] : memref<8x64xf32, #tpu.memory_space<vmem>>, vector<8x16xf32>
    %cst_14 = arith.constant dense<0.000000e+00> : vector<8x16xf32>
    %25 = tpu.matmul %24, %23, %cst_14 {dimension_numbers = #tpu.dot_dimension_numbers<[1], [1], [0], [0], [0, 0, 1, 0], [], []>} : vector<8x16xf32>, vector<16x16xf32>, vector<8x16xf32> -> vector<8x16xf32>
    %26 = arith.addf %19, %25 : vector<8x16xf32>
    %c48_i32 = arith.constant 48 : i32
    %27 = arith.addi %4, %c48_i32 : i32
    %c0_15 = arith.constant 0 : index
    %28 = arith.index_cast %27 : i32 to index
    %c0_16 = arith.constant 0 : index
    %29 = vector.load %arg2[%c0_15, %28, %c0_16] : memref<1x64x16xf32, #tpu.memory_space<vmem>>, vector<1x16x16xf32>
    %30 = vector.shape_cast %29 : vector<1x16x16xf32> to vector<16x16xf32>
    %c0_17 = arith.constant 0 : index
    %c48 = arith.constant 48 : index
    %31 = vector.load %arg3[%c0_17, %c48] : memref<8x64xf32, #tpu.memory_space<vmem>>, vector<8x16xf32>
    %cst_18 = arith.constant dense<0.000000e+00> : vector<8x16xf32>
    %32 = tpu.matmul %31, %30, %cst_18 {dimension_numbers = #tpu.dot_dimension_numbers<[1], [1], [0], [0], [0, 0, 1, 0], [], []>} : vector<8x16xf32>, vector<16x16xf32>, vector<8x16xf32> -> vector<8x16xf32>
    %33 = arith.addf %26, %32 : vector<8x16xf32>
    %34 = vector.shape_cast %33 : vector<8x16xf32> to vector<8x16x1xf32>
    %c0_19 = arith.constant 0 : index
    %c0_20 = arith.constant 0 : index
    %35 = vector.load %arg6[%c0_19, %c0_20] : memref<8x16xf32, #tpu.memory_space<vmem>>, vector<8x16xf32>
    %36 = vector.shape_cast %35 : vector<8x16xf32> to vector<8x1x16xf32>
    %37 = vector.broadcast %34 : vector<8x16x1xf32> to vector<8x16x16xf32>
    %38 = vector.broadcast %36 : vector<8x1x16xf32> to vector<8x16x16xf32>
    %39 = arith.addf %37, %38 : vector<8x16x16xf32>
    %40 = vector.shape_cast %39 : vector<8x16x16xf32> to vector<8x256xf32>
    %c0_21 = arith.constant 0 : index
    %c0_22 = arith.constant 0 : index
    %c0_23 = arith.constant 0 : index
    %41 = vector.load %arg5[%c0_21, %c0_22, %c0_23] : memref<1x8x256xf32, #tpu.memory_space<vmem>>, vector<1x8x256xf32>
    %42 = vector.shape_cast %41 : vector<1x8x256xf32> to vector<8x256xf32>
    %43 = vector.shape_cast %40 : vector<8x256xf32> to vector<1x8x256xf32>
    tpu.vector_store %arg5[%c0_21, %c0_22, %c0_23], %43 {strides = array<i32>} : memref<1x8x256xf32, #tpu.memory_space<vmem>>, vector<1x8x256xf32>,
    return
  }
  func.func @transform_0(%arg0: i32, %arg1: i32) -> (i32, i32, i32) {
    %c0_i32 = arith.constant 0 : i32
    %c0_i32_0 = arith.constant 0 : i32
    %c0_i32_1 = arith.constant 0 : i32
    return %arg0, %c0_i32, %c0_i32_0 : i32, i32, i32
  }
  func.func @transform_1(%arg0: i32, %arg1: i32) -> (i32, i32) {
    %c0_i32 = arith.constant 0 : i32
    %c0_i32_0 = arith.constant 0 : i32
    %c0_i32_1 = arith.constant 0 : i32
    return %c0_i32, %c0_i32_0 : i32, i32
  }
  func.func @transform_2(%arg0: i32, %arg1: i32) -> (i32, i32) {
    %c0_i32 = arith.constant 0 : i32
    %c0_i32_0 = arith.constant 0 : i32
    %c0_i32_1 = arith.constant 0 : i32
    return %c0_i32, %c0_i32_0 : i32, i32
  }
  func.func @transform_3(%arg0: i32, %arg1: i32) -> (i32, i32, i32) {
    %c0_i32 = arith.constant 0 : i32
    %c0_i32_0 = arith.constant 0 : i32
    return %arg0, %c0_i32, %arg1 : i32, i32, i32
  }
}

</mosaic_0001>

<llo_original>
// kernel: tpu_custom_call.1
$region0: #{tpu_custom_call.1}
  #allocation0 [shape = 'u32[]', space=smem, size = 0x4, offset = 0x4, fixed_abs, tag = 'smem constant byte address 0x4 - core index']
  #allocation1 [shape = 'u32[144,128]{1,0:T(1,128)}', space=vmem, size = 0x12000, scoped, tag = 'internal scratch']
  #allocation2 [shape = 'f32[8,16]{1,0:T(8,128)}', space=vmem, size = 0x1000, scoped, tag = 'scratch operand']
  %s0 = inlined_call_operand.vmem [shape: f32[2,64,16], index: 0, kind: input, shape index: {}]
  %s1 = inlined_call_operand.vmem [shape: f32[8,64], index: 1, kind: input, shape index: {}]
  %s2 = inlined_call_operand.vmem [shape: f32[8,64], index: 2, kind: input, shape index: {}]
  %s3 = inlined_call_operand.hbm [shape: f32[2,8,256], index: 3, kind: output, shape index: {}]
  %s4 = sld [smem:[#allocation0]]
  $region49: #{tpu_custom_call.1} parent=0
    _
  %s6 = ssub.s32 1, %s4
  %s7 = scalar_select 0, %s6, %s4
  $region1: #{tpu_custom_call.1} parent=0
    #allocation3 [shape = 'u8[16384]{0}', space=vmem, size = 0x4000, scoped, tag = 'output window, operand 0']
    #allocation4 [shape = 's32[2]{0}', space=sflag, size = 0x8, scoped, tag = 'scoped memory for tpu_custom_call.1']
    %8 = vsyncpa [#allocation4], 0
    %s9 = scalar_lea.sflag [#allocation4], 1
    %10 = vsyncpa %s9, 0
    loop: start=0, step=1, limit=4
    $region2: #{tpu_custom_call.1} parent=1 // loop_pre_header
      _
    $region3: #{tpu_custom_call.1} parent=1 // loop_header
      %s12 = sphi 0, %s16
      %p13 = scmp.ge.s32.totalorder %s12, 4
      %s19 = sphi 0, %s31
      %s20 = sphi 0, %s27
      %s21 = sphi 0, %s19
      %s22 = sphi 0, %s20
      %s23 = sphi 0, %s21
      %s24 = sphi 0, %s22
      %s34 = sphi 0, %s36
      %s37 = sphi 0, %s34
      %s38 = sphi 0, %s37
      %s54 = sphi 0, %s38
      %s58 = sphi 0, %s58
      %s60 = sphi 0, %s58
      %s61 = sphi 0, %s60
      %s75 = sphi 0, %s61
      %s79 = sphi 0, %s79
      %s81 = sphi 0, %s79
      %s82 = sphi 0, %s81
      %s96 = sphi 0, %s82
      %s104 = sphi 0, %s106
      %s107 = sphi 0, %s104
      %s108 = sphi 0, %s107
      %s124 = sphi 0, %s108
    $region4: #{tpu_custom_call.1} parent=1 // loop_header_branch
      %15 = sbr.rel (%p13) target = $region8
    $region5: #{tpu_custom_call.1} parent=1 // loop_body
      %s17 = ssub.s32 %s12, 1
      %s18 = ssub.s32 %s12, 2
      %s25 = sadd.s32 1, %s20
      %p26 = scmp.ge.s32.totalorder %s25, 1
      %s27 = scalar_select %p26, 0, %s25
      %s28 = sadd.s32 1, %s19
      %s29 = scalar_select %p26, %s28, %s19
      %p30 = scmp.ge.s32.totalorder %s29, 2
      %s31 = scalar_select %p30, 0, %s29
      %s32 = ssub.s32 %s19, %s31
      %p33 = scmp.eq.s32.totalorder %s32, 0
      %s35 = sadd.s32 %s34, 1
      %s36 = scalar_select %p33, %s34, %s35
      %p39 = pneg %p33
      %p40 = scmp.eq.s32.totalorder %s12, 1
      %p41 = por %p39, %p40
      %p42 = scmp.ne.s32.totalorder %s34, %s37
      %p43 = scmp.eq.s32.totalorder %s12, 0
      %p44 = por %p42, %p43
      %p45 = scmp.ne.s32.totalorder %s34, %s37
      %p46 = scmp.eq.s32.totalorder %s17, 1
      %p47 = por %p45, %p46
      %p48 = scmp.ne.s32.totalorder %s37, %s38
      %p49 = scmp.eq.s32.totalorder %s17, 0
      %p50 = por %p48, %p49
      %p51 = scmp.ne.s32.totalorder %s37, %s38
      %p52 = scmp.eq.s32.totalorder %s18, 1
      %p53 = por %p51, %p52
      %p55 = scmp.ne.s32.totalorder %s38, %s54
      %p56 = scmp.eq.s32.totalorder %s18, 0
      %p57 = por %p55, %p56
      %s59 = sadd.s32 %s58, 1
      %p62 = scmp.eq.s32.totalorder %s12, 1
      %p63 = scmp.ne.s32.totalorder %s58, %s60
      %p64 = scmp.eq.s32.totalorder %s12, 0
      %p65 = por %p63, %p64
      %p66 = scmp.ne.s32.totalorder %s58, %s60
      %p67 = scmp.eq.s32.totalorder %s17, 1
      %p68 = por %p66, %p67
      %p69 = scmp.ne.s32.totalorder %s60, %s61
      %p70 = scmp.eq.s32.totalorder %s17, 0
      %p71 = por %p69, %p70
      %p72 = scmp.ne.s32.totalorder %s60, %s61
      %p73 = scmp.eq.s32.totalorder %s18, 1
      %p74 = por %p72, %p73
      %p76 = scmp.ne.s32.totalorder %s61, %s75
      %p77 = scmp.eq.s32.totalorder %s18, 0
      %p78 = por %p76, %p77
      %s80 = sadd.s32 %s79, 1
      %p83 = scmp.eq.s32.totalorder %s12, 1
      %p84 = scmp.ne.s32.totalorder %s79, %s81
      %p85 = scmp.eq.s32.totalorder %s12, 0
      %p86 = por %p84, %p85
      %p87 = scmp.ne.s32.totalorder %s79, %s81
      %p88 = scmp.eq.s32.totalorder %s17, 1
      %p89 = por %p87, %p88
      %p90 = scmp.ne.s32.totalorder %s81, %s82
      %p91 = scmp.eq.s32.totalorder %s17, 0
      %p92 = por %p90, %p91
      %p93 = scmp.ne.s32.totalorder %s81, %s82
      %p94 = scmp.eq.s32.totalorder %s18, 1
      %p95 = por %p93, %p94
      %p97 = scmp.ne.s32.totalorder %s82, %s96
      %p98 = scmp.eq.s32.totalorder %s18, 0
      %p99 = por %p97, %p98
      %s100 = ssub.s32 %s19, %s31
      %s101 = ssub.s32 %s20, %s27
      %s102 = sor.u32 %s100, %s101
      %p103 = scmp.eq.s32.totalorder %s102, 0
      %s105 = sadd.s32 %s104, 1
      %s106 = scalar_select %p103, %s104, %s105
      %p109 = pneg %p103
      %p110 = scmp.eq.s32.totalorder %s12, 1
      %p111 = por %p109, %p110
      %p112 = scmp.ne.s32.totalorder %s104, %s107
      %p113 = scmp.eq.s32.totalorder %s12, 0
      %p114 = por %p112, %p113
      %p115 = scmp.ne.s32.totalorder %s104, %s107
      %p116 = scmp.eq.s32.totalorder %s17, 1
      %p117 = por %p115, %p116
      %p118 = scmp.ne.s32.totalorder %s107, %s108
      %p119 = scmp.eq.s32.totalorder %s17, 0
      %p120 = por %p118, %p119
      %p121 = scmp.ne.s32.totalorder %s107, %s108
      %p122 = scmp.eq.s32.totalorder %s18, 1
      %p123 = por %p121, %p122
      %p125 = scmp.ne.s32.totalorder %s108, %s124
      %p126 = scmp.eq.s32.totalorder %s18, 0
      %p127 = por %p125, %p126
      %p128 = scmp.le.s32.totalorder 1, %s12
      %p129 = scmp.lt.s32.totalorder %s12, 3
      %p130 = pnand %p128, %p129
      %p131 = pneg %p130
      // Predicated region
      $region9: #{tpu_custom_call.1} parent=5 // pred_check
        _
      $region10: #{tpu_custom_call.1} parent=5 // pred_check_branch
        %133 = sbr.rel (%p130) target = $region12
      $region11: #{tpu_custom_call.1} parent=5 // pred_region
        %s134 = ssub.s32 %s12, 1
        // Predicated region
        $region13: #{tpu_custom_call.1} parent=11 // pred_check
          %p135 = pneg %p71
        $region14: #{tpu_custom_call.1} parent=11 // pred_check_branch
          %137 = sbr.rel (%p135) target = $region16
        $region15: #{tpu_custom_call.1} parent=11 // pred_region
          _
        $region16: #{tpu_custom_call.1} parent=11 // pred_fallthru
          _
        // Predicated region
        $region17: #{tpu_custom_call.1} parent=11 // pred_check
          %p138 = pneg %p92
        $region18: #{tpu_custom_call.1} parent=11 // pred_check_branch
          %140 = sbr.rel (%p138) target = $region20
        $region19: #{tpu_custom_call.1} parent=11 // pred_region
          _
        $region20: #{tpu_custom_call.1} parent=11 // pred_fallthru
          _
      $region12: #{tpu_custom_call.1} parent=5 // pred_fallthru
        _
      %p141 = scmp.lt.s32.totalorder %s12, 2
      // Predicated region
      $region21: #{tpu_custom_call.1} parent=5 // pred_check
        %p142 = pneg %p141
      $region22: #{tpu_custom_call.1} parent=5 // pred_check_branch
        %144 = sbr.rel (%p142) target = $region24
      $region23: #{tpu_custom_call.1} parent=5 // pred_region
        // Predicated region
        $region25: #{tpu_custom_call.1} parent=23 // pred_check
          %p145 = pneg %p44
        $region26: #{tpu_custom_call.1} parent=23 // pred_check_branch
          %147 = sbr.rel (%p145) target = $region28
        $region27: #{tpu_custom_call.1} parent=23 // pred_region
          %p148 = scmp.lt.s32.totalorder %s19, 1
          %s149 = scalar_select %p148, %s19, 1
          %s150 = smul.addr %s149, 8
          %s151 = smul.addr %s150, 8
          %s152 = scalar_lea.vmem %s0, %s151
        $region28: #{tpu_custom_call.1} parent=23 // pred_fallthru
          _
      $region24: #{tpu_custom_call.1} parent=5 // pred_fallthru
        _
      %p153 = scmp.le.s32.totalorder 1, %s12
      %p154 = scmp.lt.s32.totalorder %s12, 3
      %p155 = pnand %p153, %p154
      %p156 = pneg %p155
      // Predicated region
      $region29: #{tpu_custom_call.1} parent=5 // pred_check
        _
      $region30: #{tpu_custom_call.1} parent=5 // pred_check_branch
        %158 = sbr.rel (%p155) target = $region32
      $region31: #{tpu_custom_call.1} parent=5 // pred_region
        %s159 = ssub.s32 %s12, 1
        %p160 = scmp.lt.s32.totalorder %s21, 1
        %s161 = scalar_select %p160, %s21, 1
        %s162 = smul.addr %s161, 8
        %s163 = smul.addr %s162, 8
        %s164 = scalar_lea.vmem %s0, %s163
        %p165 = pneg %p50
        %p166 = pneg %p47
        %p167 = pneg %p71
        %p168 = pneg %p68
        %p169 = pneg %p92
        %p170 = pneg %p89
        %p171 = pneg %p120
        %p172 = pneg %p117
        %s173 = sand.u32 %s107, 1
        %s174 = scalar_lea.sflag [#allocation4], %s173
        %s175 = sand.u32 %s107, 1
        %s176 = smul.addr %s175, 16
        %s177 = scalar_lea.vmem [#allocation3], %s176
        %p178 = scmp.lt.s32.totalorder %s21, 1
        %s179 = scalar_select %p178, %s21, 1
        %s180 = smul.addr %s179, 8
        %s181 = smul.addr %s180, 8
        %s182 = scalar_lea.vmem %s0, %s181
        %s183 = smul.u32 2, %s22
        %p184 = scmp.eq.s32.totalorder %s22, 0
        // Predicated region
        $region33: #{tpu_custom_call.1} parent=31 // pred_check
          %p185 = pneg %p184
        $region34: #{tpu_custom_call.1} parent=31 // pred_check_branch
          %187 = sbr.rel (%p185) target = $region36
        $region35: #{tpu_custom_call.1} parent=31 // pred_region
          %v188 = vld [vmem:[%s2] sm:$0xff]
          %v189 = vld [vmem:[%s182] sm:$0xff]
          %v190 = vld [vmem:[%s182 + $0x8] sm:$0xff]
          %v191 = vld [vmem:[%s182 + $0x10] sm:$0xff]
          %v192 = vld [vmem:[%s182 + $0x18] sm:$0xff]
          %v193 = vld [vmem:[%s182 + $0x20] sm:$0xff]
          %v194 = vld [vmem:[%s182 + $0x28] sm:$0xff]
          %v195 = vld [vmem:[%s182 + $0x30] sm:$0xff]
          %v196 = vld [vmem:[%s182 + $0x38] sm:$0xff]
          %vm197 = vcmask 523264
          %v199 = vsel %vm197, %v188, 0
          %201 = vmatprep.subr.mxu0 0.0
          %202 = vmatpush1.msra.mxu0 0.0
          %203 = vmatprep.subr.mxu0 0.0
          %204 = vmatpush1.msra.mxu0 0.0
          %205 = vmatprep.subr.mxu0 0.0
          %206 = vmatpush1.msra.mxu0 0.0
          %207 = vmatprep.subr.mxu0 0.0
          %208 = vmatpush1.msra.mxu0 0.0
          %209 = vmatprep.subr.mxu0 0.0
          %210 = vmatpush1.msra.mxu0 0.0
          %211 = vmatprep.subr.mxu0 0.0
          %212 = vmatpush1.msra.mxu0 0.0
          %213 = vmatprep.subr.mxu0 0.0
          %214 = vmatpush1.msra.mxu0 0.0
          %215 = vmatprep.subr.mxu0 0.0
          %216 = vmatpush1.msra.mxu0 0.0
          %217 = vmatprep.subr.mxu0 0.0
          %218 = vmatpush1.msra.mxu0 %v196
          %219 = vmatprep.subr.mxu0 0.0
          %220 = vmatpush1.msra.mxu0 %v195
          %221 = vmatprep.subr.mxu0 0.0
          %222 = vmatpush1.msra.mxu0 %v194
          %223 = vmatprep.subr.mxu0 0.0
          %224 = vmatpush1.msra.mxu0 %v193
          %225 = vmatprep.subr.mxu0 0.0
          %226 = vmatpush1.msra.mxu0 %v192
          %227 = vmatprep.subr.mxu0 0.0
          %228 = vmatpush1.msra.mxu0 %v191
          %229 = vmatprep.subr.mxu0 0.0
          %230 = vmatpush1.msra.mxu0 %v190
          %231 = vmatprep.subr.mxu0 0.0
          %232 = vmatpush1.msra.mxu0 %v189
          %233 = vmatprep.subr.mxu0 0.0
          %234 = vmatpush2.msra.mxu0 0.0
          %235 = vmatprep.subr.mxu0 0.0
          %236 = vmatpush2.msra.mxu0 0.0
          %237 = vmatprep.subr.mxu0 0.0
          %238 = vmatpush2.msra.mxu0 0.0
          %239 = vmatprep.subr.mxu0 0.0
          %240 = vmatpush2.msra.mxu0 0.0
          %241 = vmatprep.subr.mxu0 0.0
          %242 = vmatpush2.msra.mxu0 0.0
          %243 = vmatprep.subr.mxu0 0.0
          %244 = vmatpush2.msra.mxu0 0.0
          %245 = vmatprep.subr.mxu0 0.0
          %246 = vmatpush2.msra.mxu0 0.0
          %247 = vmatprep.subr.mxu0 0.0
          %248 = vmatpush2.msra.mxu0 0.0
          %249 = vmatprep.subr.mxu0 0.0
          %250 = vmatpush2.msra.mxu0 0.0
          %251 = vmatprep.subr.mxu0 0.0
          %252 = vmatpush2.msra.mxu0 0.0
          %253 = vmatprep.subr.mxu0 0.0
          %254 = vmatpush2.msra.mxu0 0.0
          %255 = vmatprep.subr.mxu0 0.0
          %256 = vmatpush2.msra.mxu0 0.0
          %257 = vmatprep.subr.mxu0 0.0
          %258 = vmatpush2.msra.mxu0 0.0
          %259 = vmatprep.subr.mxu0 0.0
          %260 = vmatpush2.msra.mxu0 0.0
          %261 = vmatprep.subr.mxu0 0.0
          %262 = vmatpush2.msra.mxu0 0.0
          %263 = vmatprep.subr.mxu0 0.0
          %264 = vmatpush2.msra.mxu0 0.0
          %265 = vmatprep.mubr.f32.mxu0 0.0
          %266 = vmatmul.mubr.f32.gmra.mxu0 %v199
          %v267 = vpop.f32.mrf.mxu0
          %v268 = vadd.f32 0.0, %v267
          %v269 = vpop.f32.mrf.mxu0
          %270 = vdwg.mxu0
          %vm271 = vcmask 130048
          %272 = vst.msk [vmem:[#allocation2] sm:$0xff] %vm271, %v268
        $region36: #{tpu_custom_call.1} parent=31 // pred_fallthru
          _
        %s273 = smul.u32 %s22, 16
        %s274 = scalar_lea.vmem %s182, %s273
        %v275 = vld [vmem:[%s274] sm:$0xff]
        %v276 = vld [vmem:[%s274 + $0x8] sm:$0xff]
        %v277 = vld [vmem:[%s1] sm:$0xff]
        %s278 = sadd.s32 %s273, 16
        %s279 = scalar_lea.vmem %s182, %s278
        %v280 = vld [vmem:[%s279] sm:$0xff]
        %v281 = vld [vmem:[%s279 + $0x8] sm:$0xff]
        %283 = vrot.lane.b32.xlu0 %v277, 112
        %v284 = vpop.permute.xlu0 %283
        %vm285 = vcmask 130048
        %v286 = vsel %vm285, %v284, 0
        %v289 = vsel %vm285, %v280, 0
        %v292 = vsel %vm285, %v281, 0
        %294 = vmatprep.subr.mxu0 0.0
        %295 = vmatpush1.xpose.msra.mxu0 0.0
        %296 = vmatprep.subr.mxu0 0.0
        %297 = vmatpush1.xpose.msra.mxu0 0.0
        %298 = vmatprep.subr.mxu0 0.0
        %299 = vmatpush1.xpose.msra.mxu0 0.0
        %300 = vmatprep.subr.mxu0 0.0
        %301 = vmatpush1.xpose.msra.mxu0 0.0
        %302 = vmatprep.subr.mxu0 0.0
        %303 = vmatpush1.xpose.msra.mxu0 0.0
        %304 = vmatprep.subr.mxu0 0.0
        %305 = vmatpush1.xpose.msra.mxu0 0.0
        %306 = vmatprep.subr.mxu0 0.0
        %307 = vmatpush1.xpose.msra.mxu0 0.0
        %308 = vmatprep.subr.mxu0 0.0
        %309 = vmatpush1.xpose.msra.mxu0 0.0
        %310 = vmatprep.subr.mxu0 0.0
        %311 = vmatpush1.xpose.msra.mxu0 0.0
        %312 = vmatprep.subr.mxu0 0.0
        %313 = vmatpush1.xpose.msra.mxu0 0.0
        %314 = vmatprep.subr.mxu0 0.0
        %315 = vmatpush1.xpose.msra.mxu0 0.0
        %316 = vmatprep.subr.mxu0 0.0
        %317 = vmatpush1.xpose.msra.mxu0 0.0
        %318 = vmatprep.subr.mxu0 0.0
        %319 = vmatpush1.xpose.msra.mxu0 0.0
        %320 = vmatprep.subr.mxu0 0.0
        %321 = vmatpush1.xpose.msra.mxu0 0.0
        %322 = vmatprep.subr.mxu0 0.0
        %323 = vmatpush1.xpose.msra.mxu0 %v292
        %324 = vmatprep.subr.mxu0 0.0
        %325 = vmatpush1.xpose.msra.mxu0 %v289
        %326 = vmatprep.subr.mxu0 0.0
        %327 = vmatpush2.xpose.msra.mxu0 0.0
        %328 = vmatprep.subr.mxu0 0.0
        %329 = vmatpush2.xpose.msra.mxu0 0.0
        %330 = vmatprep.subr.mxu0 0.0
        %331 = vmatpush2.xpose.msra.mxu0 0.0
        %332 = vmatprep.subr.mxu0 0.0
        %333 = vmatpush2.xpose.msra.mxu0 0.0
        %334 = vmatprep.subr.mxu0 0.0
        %335 = vmatpush2.xpose.msra.mxu0 0.0
        %336 = vmatprep.subr.mxu0 0.0
        %337 = vmatpush2.xpose.msra.mxu0 0.0
        %338 = vmatprep.subr.mxu0 0.0
        %339 = vmatpush2.xpose.msra.mxu0 0.0
        %340 = vmatprep.subr.mxu0 0.0
        %341 = vmatpush2.xpose.msra.mxu0 0.0
        %342 = vmatprep.subr.mxu0 0.0
        %343 = vmatpush2.xpose.msra.mxu0 0.0
        %344 = vmatprep.subr.mxu0 0.0
        %345 = vmatpush2.xpose.msra.mxu0 0.0
        %346 = vmatprep.subr.mxu0 0.0
        %347 = vmatpush2.xpose.msra.mxu0 0.0
        %348 = vmatprep.subr.mxu0 0.0
        %349 = vmatpush2.xpose.msra.mxu0 0.0
        %350 = vmatprep.subr.mxu0 0.0
        %351 = vmatpush2.xpose.msra.mxu0 0.0
        %352 = vmatprep.subr.mxu0 0.0
        %353 = vmatpush2.xpose.msra.mxu0 0.0
        %354 = vmatprep.subr.mxu0 0.0
        %355 = vmatpush2.xpose.msra.mxu0 0.0
        %356 = vmatprep.subr.mxu0 0.0
        %357 = vmatpush2.xpose.msra.mxu0 0.0
        %358 = vmatprep.mubr.f32.mxu0 0.0
        %359 = vmatmul.mubr.f32.gmra.mxu0 %v286
        %v360 = vpop.f32.mrf.mxu0
        %v361 = vadd.f32 0.0, %v360
        %v362 = vpop.f32.mrf.mxu0
        %363 = vdwg.mxu0
        %v364 = vsel %vm285, %v277, 0
        %v367 = vsel %vm285, %v275, 0
        %v370 = vsel %vm285, %v276, 0
        %372 = vmatprep.subr.mxu0 0.0
        %373 = vmatpush1.xpose.msra.mxu0 0.0
        %374 = vmatprep.subr.mxu0 0.0
        %375 = vmatpush1.xpose.msra.mxu0 0.0
        %376 = vmatprep.subr.mxu0 0.0
        %377 = vmatpush1.xpose.msra.mxu0 0.0
        %378 = vmatprep.subr.mxu0 0.0
        %379 = vmatpush1.xpose.msra.mxu0 0.0
        %380 = vmatprep.subr.mxu0 0.0
        %381 = vmatpush1.xpose.msra.mxu0 0.0
        %382 = vmatprep.subr.mxu0 0.0
        %383 = vmatpush1.xpose.msra.mxu0 0.0
        %384 = vmatprep.subr.mxu0 0.0
        %385 = vmatpush1.xpose.msra.mxu0 0.0
        %386 = vmatprep.subr.mxu0 0.0
        %387 = vmatpush1.xpose.msra.mxu0 0.0
        %388 = vmatprep.subr.mxu0 0.0
        %389 = vmatpush1.xpose.msra.mxu0 0.0
        %390 = vmatprep.subr.mxu0 0.0
        %391 = vmatpush1.xpose.msra.mxu0 0.0
        %392 = vmatprep.subr.mxu0 0.0
        %393 = vmatpush1.xpose.msra.mxu0 0.0
        %394 = vmatprep.subr.mxu0 0.0
        %395 = vmatpush1.xpose.msra.mxu0 0.0
        %396 = vmatprep.subr.mxu0 0.0
        %397 = vmatpush1.xpose.msra.mxu0 0.0
        %398 = vmatprep.subr.mxu0 0.0
        %399 = vmatpush1.xpose.msra.mxu0 0.0
        %400 = vmatprep.subr.mxu0 0.0
        %401 = vmatpush1.xpose.msra.mxu0 %v370
        %402 = vmatprep.subr.mxu0 0.0
        %403 = vmatpush1.xpose.msra.mxu0 %v367
        %404 = vmatprep.subr.mxu0 0.0
        %405 = vmatpush2.xpose.msra.mxu0 0.0
        %406 = vmatprep.subr.mxu0 0.0
        %407 = vmatpush2.xpose.msra.mxu0 0.0
        %408 = vmatprep.subr.mxu0 0.0
        %409 = vmatpush2.xpose.msra.mxu0 0.0
        %410 = vmatprep.subr.mxu0 0.0
        %411 = vmatpush2.xpose.msra.mxu0 0.0
        %412 = vmatprep.subr.mxu0 0.0
        %413 = vmatpush2.xpose.msra.mxu0 0.0
        %414 = vmatprep.subr.mxu0 0.0
        %415 = vmatpush2.xpose.msra.mxu0 0.0
        %416 = vmatprep.subr.mxu0 0.0
        %417 = vmatpush2.xpose.msra.mxu0 0.0
        %418 = vmatprep.subr.mxu0 0.0
        %419 = vmatpush2.xpose.msra.mxu0 0.0
        %420 = vmatprep.subr.mxu0 0.0
        %421 = vmatpush2.xpose.msra.mxu0 0.0
        %422 = vmatprep.subr.mxu0 0.0
        %423 = vmatpush2.xpose.msra.mxu0 0.0
        %424 = vmatprep.subr.mxu0 0.0
        %425 = vmatpush2.xpose.msra.mxu0 0.0
        %426 = vmatprep.subr.mxu0 0.0
        %427 = vmatpush2.xpose.msra.mxu0 0.0
        %428 = vmatprep.subr.mxu0 0.0
        %429 = vmatpush2.xpose.msra.mxu0 0.0
        %430 = vmatprep.subr.mxu0 0.0
        %431 = vmatpush2.xpose.msra.mxu0 0.0
        %432 = vmatprep.subr.mxu0 0.0
        %433 = vmatpush2.xpose.msra.mxu0 0.0
        %434 = vmatprep.subr.mxu0 0.0
        %435 = vmatpush2.xpose.msra.mxu0 0.0
        %436 = vmatprep.mubr.f32.mxu0 0.0
        %437 = vmatmul.mubr.f32.gmra.mxu0 %v364
        %v438 = vpop.f32.mrf.mxu0
        %v439 = vadd.f32 %v361, %v438
        %v440 = vpop.f32.mrf.mxu0
        %441 = vdwg.mxu0
        %s442 = sadd.s32 %s273, 32
        %s443 = scalar_lea.vmem %s182, %s442
        %v444 = vld [vmem:[%s443] sm:$0xff]
        %v445 = vld [vmem:[%s443 + $0x8] sm:$0xff]
        %446 = vrot.lane.b32.xlu0 %v277, 96
        %v447 = vpop.permute.xlu0 %446
        %v448 = vsel %vm285, %v447, 0
        %v451 = vsel %vm285, %v444, 0
        %v454 = vsel %vm285, %v445, 0
        %456 = vmatprep.subr.mxu0 0.0
        %457 = vmatpush1.xpose.msra.mxu0 0.0
        %458 = vmatprep.subr.mxu0 0.0
        %459 = vmatpush1.xpose.msra.mxu0 0.0
        %460 = vmatprep.subr.mxu0 0.0
        %461 = vmatpush1.xpose.msra.mxu0 0.0
        %462 = vmatprep.subr.mxu0 0.0
        %463 = vmatpush1.xpose.msra.mxu0 0.0
        %464 = vmatprep.subr.mxu0 0.0
        %465 = vmatpush1.xpose.msra.mxu0 0.0
        %466 = vmatprep.subr.mxu0 0.0
        %467 = vmatpush1.xpose.msra.mxu0 0.0
        %468 = vmatprep.subr.mxu0 0.0
        %469 = vmatpush1.xpose.msra.mxu0 0.0
        %470 = vmatprep.subr.mxu0 0.0
        %471 = vmatpush1.xpose.msra.mxu0 0.0
        %472 = vmatprep.subr.mxu0 0.0
        %473 = vmatpush1.xpose.msra.mxu0 0.0
        %474 = vmatprep.subr.mxu0 0.0
        %475 = vmatpush1.xpose.msra.mxu0 0.0
        %476 = vmatprep.subr.mxu0 0.0
        %477 = vmatpush1.xpose.msra.mxu0 0.0
        %478 = vmatprep.subr.mxu0 0.0
        %479 = vmatpush1.xpose.msra.mxu0 0.0
        %480 = vmatprep.subr.mxu0 0.0
        %481 = vmatpush1.xpose.msra.mxu0 0.0
        %482 = vmatprep.subr.mxu0 0.0
        %483 = vmatpush1.xpose.msra.mxu0 0.0
        %484 = vmatprep.subr.mxu0 0.0
        %485 = vmatpush1.xpose.msra.mxu0 %v454
        %486 = vmatprep.subr.mxu0 0.0
        %487 = vmatpush1.xpose.msra.mxu0 %v451
        %488 = vmatprep.subr.mxu0 0.0
        %489 = vmatpush2.xpose.msra.mxu0 0.0
        %490 = vmatprep.subr.mxu0 0.0
        %491 = vmatpush2.xpose.msra.mxu0 0.0
        %492 = vmatprep.subr.mxu0 0.0
        %493 = vmatpush2.xpose.msra.mxu0 0.0
        %494 = vmatprep.subr.mxu0 0.0
        %495 = vmatpush2.xpose.msra.mxu0 0.0
        %496 = vmatprep.subr.mxu0 0.0
        %497 = vmatpush2.xpose.msra.mxu0 0.0
        %498 = vmatprep.subr.mxu0 0.0
        %499 = vmatpush2.xpose.msra.mxu0 0.0
        %500 = vmatprep.subr.mxu0 0.0
        %501 = vmatpush2.xpose.msra.mxu0 0.0
        %502 = vmatprep.subr.mxu0 0.0
        %503 = vmatpush2.xpose.msra.mxu0 0.0
        %504 = vmatprep.subr.mxu0 0.0
        %505 = vmatpush2.xpose.msra.mxu0 0.0
        %506 = vmatprep.subr.mxu0 0.0
        %507 = vmatpush2.xpose.msra.mxu0 0.0
        %508 = vmatprep.subr.mxu0 0.0
        %509 = vmatpush2.xpose.msra.mxu0 0.0
        %510 = vmatprep.subr.mxu0 0.0
        %511 = vmatpush2.xpose.msra.mxu0 0.0
        %512 = vmatprep.subr.mxu0 0.0
        %513 = vmatpush2.xpose.msra.mxu0 0.0
        %514 = vmatprep.subr.mxu0 0.0
        %515 = vmatpush2.xpose.msra.mxu0 0.0
        %516 = vmatprep.subr.mxu0 0.0
        %517 = vmatpush2.xpose.msra.mxu0 0.0
        %518 = vmatprep.subr.mxu0 0.0
        %519 = vmatpush2.xpose.msra.mxu0 0.0
        %520 = vmatprep.mubr.f32.mxu0 0.0
        %521 = vmatmul.mubr.f32.gmra.mxu0 %v448
        %v522 = vpop.f32.mrf.mxu0
        %v523 = vadd.f32 0.0, %v522
        %v524 = vpop.f32.mrf.mxu0
        %525 = vdwg.mxu0
        %v526 = vadd.f32 %v439, %v523
        %s527 = sadd.s32 %s273, 48
        %s528 = scalar_lea.vmem %s182, %s527
        %v529 = vld [vmem:[%s528] sm:$0xff]
        %v530 = vld [vmem:[%s528 + $0x8] sm:$0xff]
        %531 = vrot.lane.b32.xlu0 %v277, 80
        %v532 = vpop.permute.xlu0 %531
        %v533 = vsel %vm285, %v532, 0
        %v536 = vsel %vm285, %v529, 0
        %v539 = vsel %vm285, %v530, 0
        %541 = vmatprep.subr.mxu0 0.0
        %542 = vmatpush1.xpose.msra.mxu0 0.0
        %543 = vmatprep.subr.mxu0 0.0
        %544 = vmatpush1.xpose.msra.mxu0 0.0
        %545 = vmatprep.subr.mxu0 0.0
        %546 = vmatpush1.xpose.msra.mxu0 0.0
        %547 = vmatprep.subr.mxu0 0.0
        %548 = vmatpush1.xpose.msra.mxu0 0.0
        %549 = vmatprep.subr.mxu0 0.0
        %550 = vmatpush1.xpose.msra.mxu0 0.0
        %551 = vmatprep.subr.mxu0 0.0
        %552 = vmatpush1.xpose.msra.mxu0 0.0
        %553 = vmatprep.subr.mxu0 0.0
        %554 = vmatpush1.xpose.msra.mxu0 0.0
        %555 = vmatprep.subr.mxu0 0.0
        %556 = vmatpush1.xpose.msra.mxu0 0.0
        %557 = vmatprep.subr.mxu0 0.0
        %558 = vmatpush1.xpose.msra.mxu0 0.0
        %559 = vmatprep.subr.mxu0 0.0
        %560 = vmatpush1.xpose.msra.mxu0 0.0
        %561 = vmatprep.subr.mxu0 0.0
        %562 = vmatpush1.xpose.msra.mxu0 0.0
        %563 = vmatprep.subr.mxu0 0.0
        %564 = vmatpush1.xpose.msra.mxu0 0.0
        %565 = vmatprep.subr.mxu0 0.0
        %566 = vmatpush1.xpose.msra.mxu0 0.0
        %567 = vmatprep.subr.mxu0 0.0
        %568 = vmatpush1.xpose.msra.mxu0 0.0
        %569 = vmatprep.subr.mxu0 0.0
        %570 = vmatpush1.xpose.msra.mxu0 %v539
        %571 = vmatprep.subr.mxu0 0.0
        %572 = vmatpush1.xpose.msra.mxu0 %v536
        %573 = vmatprep.subr.mxu0 0.0
        %574 = vmatpush2.xpose.msra.mxu0 0.0
        %575 = vmatprep.subr.mxu0 0.0
        %576 = vmatpush2.xpose.msra.mxu0 0.0
        %577 = vmatprep.subr.mxu0 0.0
        %578 = vmatpush2.xpose.msra.mxu0 0.0
        %579 = vmatprep.subr.mxu0 0.0
        %580 = vmatpush2.xpose.msra.mxu0 0.0
        %581 = vmatprep.subr.mxu0 0.0
        %582 = vmatpush2.xpose.msra.mxu0 0.0
        %583 = vmatprep.subr.mxu0 0.0
        %584 = vmatpush2.xpose.msra.mxu0 0.0
        %585 = vmatprep.subr.mxu0 0.0
        %586 = vmatpush2.xpose.msra.mxu0 0.0
        %587 = vmatprep.subr.mxu0 0.0
        %588 = vmatpush2.xpose.msra.mxu0 0.0
        %589 = vmatprep.subr.mxu0 0.0
        %590 = vmatpush2.xpose.msra.mxu0 0.0
        %591 = vmatprep.subr.mxu0 0.0
        %592 = vmatpush2.xpose.msra.mxu0 0.0
        %593 = vmatprep.subr.mxu0 0.0
        %594 = vmatpush2.xpose.msra.mxu0 0.0
        %595 = vmatprep.subr.mxu0 0.0
        %596 = vmatpush2.xpose.msra.mxu0 0.0
        %597 = vmatprep.subr.mxu0 0.0
        %598 = vmatpush2.xpose.msra.mxu0 0.0
        %599 = vmatprep.subr.mxu0 0.0
        %600 = vmatpush2.xpose.msra.mxu0 0.0
        %601 = vmatprep.subr.mxu0 0.0
        %602 = vmatpush2.xpose.msra.mxu0 0.0
        %603 = vmatprep.subr.mxu0 0.0
        %604 = vmatpush2.xpose.msra.mxu0 0.0
        %605 = vmatprep.mubr.f32.mxu0 0.0
        %606 = vmatmul.mubr.f32.gmra.mxu0 %v533
        %v607 = vpop.f32.mrf.mxu0
        %v608 = vadd.f32 0.0, %v607
        %v609 = vpop.f32.mrf.mxu0
        %610 = vdwg.mxu0
        %v611 = vadd.f32 %v526, %v608
        %v612 = vlaneseq
        %v613 = vshrl.u32 %v612, 7
        %v614 = vsub.s32 0, %v613
        %v615 = vrot.slane %v611, %v614
        %617 = vbcast.lane.b32.xlu0 %v615, 256
        %v618 = vpop.permute.xlu0 %617
        %s620 = sor.u32 256, 8
        %621 = vbcast.lane.b32.xlu0 %v615, %s620
        %v622 = vpop.permute.xlu0 %621
        %v623 = vlaneseq
        %v624 = vshrl.u32 %v623, 7
        %v625 = vsub.s32 1, %v624
        %v626 = vrot.slane %v611, %v625
        %628 = vbcast.lane.b32.xlu0 %v626, 256
        %v629 = vpop.permute.xlu0 %628
        %s631 = sor.u32 256, 8
        %632 = vbcast.lane.b32.xlu0 %v626, %s631
        %v633 = vpop.permute.xlu0 %632
        %v634 = vlaneseq
        %v635 = vshrl.u32 %v634, 7
        %v636 = vsub.s32 2, %v635
        %v637 = vrot.slane %v611, %v636
        %639 = vbcast.lane.b32.xlu0 %v637, 256
        %v640 = vpop.permute.xlu0 %639
        %s642 = sor.u32 256, 8
        %643 = vbcast.lane.b32.xlu0 %v637, %s642
        %v644 = vpop.permute.xlu0 %643
        %v645 = vlaneseq
        %v646 = vshrl.u32 %v645, 7
        %v647 = vsub.s32 3, %v646
        %v648 = vrot.slane %v611, %v647
        %650 = vbcast.lane.b32.xlu0 %v648, 256
        %v651 = vpop.permute.xlu0 %650
        %s653 = sor.u32 256, 8
        %654 = vbcast.lane.b32.xlu0 %v648, %s653
        %v655 = vpop.permute.xlu0 %654
        %v656 = vlaneseq
        %v657 = vshrl.u32 %v656, 7
        %v658 = vsub.s32 4, %v657
        %v659 = vrot.slane %v611, %v658
        %661 = vbcast.lane.b32.xlu0 %v659, 256
        %v662 = vpop.permute.xlu0 %661
        %s664 = sor.u32 256, 8
        %665 = vbcast.lane.b32.xlu0 %v659, %s664
        %v666 = vpop.permute.xlu0 %665
        %v667 = vlaneseq
        %v668 = vshrl.u32 %v667, 7
        %v669 = vsub.s32 5, %v668
        %v670 = vrot.slane %v611, %v669
        %672 = vbcast.lane.b32.xlu0 %v670, 256
        %v673 = vpop.permute.xlu0 %672
        %s675 = sor.u32 256, 8
        %676 = vbcast.lane.b32.xlu0 %v670, %s675
        %v677 = vpop.permute.xlu0 %676
        %v678 = vlaneseq
        %v679 = vshrl.u32 %v678, 7
        %v680 = vsub.s32 6, %v679
        %v681 = vrot.slane %v611, %v680
        %683 = vbcast.lane.b32.xlu0 %v681, 256
        %v684 = vpop.permute.xlu0 %683
        %s686 = sor.u32 256, 8
        %687 = vbcast.lane.b32.xlu0 %v681, %s686
        %v688 = vpop.permute.xlu0 %687
        %v689 = vlaneseq
        %v690 = vshrl.u32 %v689, 7
        %v691 = vsub.s32 7, %v690
        %v692 = vrot.slane %v611, %v691
        %694 = vbcast.lane.b32.xlu0 %v692, 256
        %v695 = vpop.permute.xlu0 %694
        %s697 = sor.u32 256, 8
        %698 = vbcast.lane.b32.xlu0 %v692, %s697
        %v699 = vpop.permute.xlu0 %698
        %v700 = vld [vmem:[#allocation2] sm:$0xff]
        %v702 = vcombine.high %v700, %v700
        %v704 = vunpack.c.l.s4 1966171168
        %v705 = vunpack.c.0.s8 %v704
        %v706 = vlaneseq
        %v707 = vshrl.u32 %v706, 7
        %v708 = vsub.s32 %v705, %v707
        %v709 = vrot.slane %v700, %v708
        %v711 = vunpack.c.l.s4 1966171168
        %v712 = vunpack.c.0.s8 %v711
        %v713 = vlaneseq
        %v714 = vshrl.u32 %v713, 7
        %v715 = vsub.s32 %v712, %v714
        %v716 = vrot.slane %v702, %v715
        %v717 = vcombine.high %v709, %v709
        %v718 = vcombine.high %v716, %v716
        %v720 = vunpack.c.l.s4 1966171168
        %v721 = vunpack.c.0.s8 %v720
        %v722 = vlaneseq
        %v723 = vshrl.u32 %v722, 7
        %v724 = vsub.s32 %v721, %v723
        %v725 = vrot.slane %v709, %v724
        %v727 = vunpack.c.l.s4 1966171168
        %v728 = vunpack.c.0.s8 %v727
        %v729 = vlaneseq
        %v730 = vshrl.u32 %v729, 7
        %v731 = vsub.s32 %v728, %v730
        %v732 = vrot.slane %v716, %v731
        %v734 = vunpack.c.l.s4 1966171168
        %v735 = vunpack.c.0.s8 %v734
        %v736 = vlaneseq
        %v737 = vshrl.u32 %v736, 7
        %v738 = vsub.s32 %v735, %v737
        %v739 = vrot.slane %v717, %v738
        %v741 = vunpack.c.l.s4 1966171168
        %v742 = vunpack.c.0.s8 %v741
        %v743 = vlaneseq
        %v744 = vshrl.u32 %v743, 7
        %v745 = vsub.s32 %v742, %v744
        %v746 = vrot.slane %v718, %v745
        %v747 = vcombine.high %v725, %v725
        %v748 = vcombine.high %v732, %v732
        %v749 = vcombine.high %v739, %v739
        %v750 = vcombine.high %v746, %v746
        %v751 = vlaneseq
        %v752 = vshrl.u32 %v751, 7
        %v753 = vsub.s32 0, %v752
        %v754 = vrot.slane %v725, %v753
        %v755 = vlaneseq
        %v756 = vshrl.u32 %v755, 7
        %v757 = vsub.s32 0, %v756
        %v758 = vrot.slane %v739, %v757
        %v759 = vlaneseq
        %v760 = vshrl.u32 %v759, 7
        %v761 = vsub.s32 0, %v760
        %v762 = vrot.slane %v747, %v761
        %v763 = vlaneseq
        %v764 = vshrl.u32 %v763, 7
        %v765 = vsub.s32 0, %v764
        %v766 = vrot.slane %v749, %v765
        %v767 = vlaneseq
        %v768 = vshrl.u32 %v767, 7
        %v769 = vsub.s32 0, %v768
        %v770 = vrot.slane %v732, %v769
        %v771 = vlaneseq
        %v772 = vshrl.u32 %v771, 7
        %v773 = vsub.s32 0, %v772
        %v774 = vrot.slane %v746, %v773
        %v775 = vlaneseq
        %v776 = vshrl.u32 %v775, 7
        %v777 = vsub.s32 0, %v776
        %v778 = vrot.slane %v748, %v777
        %v779 = vlaneseq
        %v780 = vshrl.u32 %v779, 7
        %v781 = vsub.s32 0, %v780
        %v782 = vrot.slane %v750, %v781
        %v791 = vadd.f32 %v618, %v754
        %v792 = vadd.f32 %v622, %v754
        %v793 = vadd.f32 %v629, %v758
        %v794 = vadd.f32 %v633, %v758
        %v795 = vadd.f32 %v640, %v762
        %v796 = vadd.f32 %v644, %v762
        %v797 = vadd.f32 %v651, %v766
        %v798 = vadd.f32 %v655, %v766
        %v799 = vadd.f32 %v662, %v770
        %v800 = vadd.f32 %v666, %v770
        %v801 = vadd.f32 %v673, %v774
        %v802 = vadd.f32 %v677, %v774
        %v803 = vadd.f32 %v684, %v778
        %v804 = vadd.f32 %v688, %v778
        %v805 = vadd.f32 %v695, %v782
        %v806 = vadd.f32 %v699, %v782
        %v807 = vcombine.low %v791, %v795
        %v808 = vcombine.high %v791, %v795
        %v810 = vunpack.c.l.s4 1983009808
        %v811 = vunpack.c.0.s8 %v810
        %v812 = vlaneseq
        %v813 = vshrl.u32 %v812, 7
        %v814 = vsub.s32 %v811, %v813
        %v815 = vrot.slane %v807, %v814
        %v817 = vunpack.c.l.s4 1983009808
        %v818 = vunpack.c.0.s8 %v817
        %v819 = vlaneseq
        %v820 = vshrl.u32 %v819, 7
        %v821 = vsub.s32 %v818, %v820
        %v822 = vrot.slane %v808, %v821
        %v823 = vcombine.low %v793, %v797
        %v824 = vcombine.high %v793, %v797
        %v826 = vunpack.c.l.s4 1983009808
        %v827 = vunpack.c.0.s8 %v826
        %v828 = vlaneseq
        %v829 = vshrl.u32 %v828, 7
        %v830 = vsub.s32 %v827, %v829
        %v831 = vrot.slane %v823, %v830
        %v833 = vunpack.c.l.s4 1983009808
        %v834 = vunpack.c.0.s8 %v833
        %v835 = vlaneseq
        %v836 = vshrl.u32 %v835, 7
        %v837 = vsub.s32 %v834, %v836
        %v838 = vrot.slane %v824, %v837
        %v839 = vcombine.low %v799, %v803
        %v840 = vcombine.high %v799, %v803
        %v842 = vunpack.c.l.s4 1983009808
        %v843 = vunpack.c.0.s8 %v842
        %v844 = vlaneseq
        %v845 = vshrl.u32 %v844, 7
        %v846 = vsub.s32 %v843, %v845
        %v847 = vrot.slane %v839, %v846
        %v849 = vunpack.c.l.s4 1983009808
        %v850 = vunpack.c.0.s8 %v849
        %v851 = vlaneseq
        %v852 = vshrl.u32 %v851, 7
        %v853 = vsub.s32 %v850, %v852
        %v854 = vrot.slane %v840, %v853
        %v855 = vcombine.low %v801, %v805
        %v856 = vcombine.high %v801, %v805
        %v858 = vunpack.c.l.s4 1983009808
        %v859 = vunpack.c.0.s8 %v858
        %v860 = vlaneseq
        %v861 = vshrl.u32 %v860, 7
        %v862 = vsub.s32 %v859, %v861
        %v863 = vrot.slane %v855, %v862
        %v865 = vunpack.c.l.s4 1983009808
        %v866 = vunpack.c.0.s8 %v865
        %v867 = vlaneseq
        %v868 = vshrl.u32 %v867, 7
        %v869 = vsub.s32 %v866, %v868
        %v870 = vrot.slane %v856, %v869
        %v871 = vcombine.low %v815, %v831
        %v872 = vcombine.high %v815, %v831
        %v874 = vunpack.c.l.s4 1934713408
        %v875 = vunpack.c.0.s8 %v874
        %v876 = vlaneseq
        %v877 = vshrl.u32 %v876, 7
        %v878 = vsub.s32 %v875, %v877
        %v879 = vrot.slane %v871, %v878
        %v881 = vunpack.c.l.s4 1934713408
        %v882 = vunpack.c.0.s8 %v881
        %v883 = vlaneseq
        %v884 = vshrl.u32 %v883, 7
        %v885 = vsub.s32 %v882, %v884
        %v886 = vrot.slane %v872, %v885
        %v887 = vcombine.low %v822, %v838
        %v888 = vcombine.high %v822, %v838
        %v890 = vunpack.c.l.s4 1934713408
        %v891 = vunpack.c.0.s8 %v890
        %v892 = vlaneseq
        %v893 = vshrl.u32 %v892, 7
        %v894 = vsub.s32 %v891, %v893
        %v895 = vrot.slane %v887, %v894
        %v897 = vunpack.c.l.s4 1934713408
        %v898 = vunpack.c.0.s8 %v897
        %v899 = vlaneseq
        %v900 = vshrl.u32 %v899, 7
        %v901 = vsub.s32 %v898, %v900
        %v902 = vrot.slane %v888, %v901
        %v903 = vcombine.low %v847, %v863
        %v904 = vcombine.high %v847, %v863
        %v906 = vunpack.c.l.s4 1934713408
        %v907 = vunpack.c.0.s8 %v906
        %v908 = vlaneseq
        %v909 = vshrl.u32 %v908, 7
        %v910 = vsub.s32 %v907, %v909
        %v911 = vrot.slane %v903, %v910
        %v913 = vunpack.c.l.s4 1934713408
        %v914 = vunpack.c.0.s8 %v913
        %v915 = vlaneseq
        %v916 = vshrl.u32 %v915, 7
        %v917 = vsub.s32 %v914, %v916
        %v918 = vrot.slane %v904, %v917
        %v919 = vcombine.low %v854, %v870
        %v920 = vcombine.high %v854, %v870
        %v922 = vunpack.c.l.s4 1934713408
        %v923 = vunpack.c.0.s8 %v922
        %v924 = vlaneseq
        %v925 = vshrl.u32 %v924, 7
        %v926 = vsub.s32 %v923, %v925
        %v927 = vrot.slane %v919, %v926
        %v929 = vunpack.c.l.s4 1934713408
        %v930 = vunpack.c.0.s8 %v929
        %v931 = vlaneseq
        %v932 = vshrl.u32 %v931, 7
        %v933 = vsub.s32 %v930, %v932
        %v934 = vrot.slane %v920, %v933
        %v935 = vcombine.low %v879, %v911
        %v936 = vcombine.high %v879, %v911
        %v937 = vcombine.low %v886, %v918
        %v938 = vcombine.high %v886, %v918
        %v939 = vcombine.low %v895, %v927
        %v940 = vcombine.high %v895, %v927
        %v941 = vcombine.low %v902, %v934
        %v942 = vcombine.high %v902, %v934
        %v943 = vcombine.low %v792, %v796
        %v944 = vcombine.high %v792, %v796
        %v946 = vunpack.c.l.s4 1983009808
        %v947 = vunpack.c.0.s8 %v946
        %v948 = vlaneseq
        %v949 = vshrl.u32 %v948, 7
        %v950 = vsub.s32 %v947, %v949
        %v951 = vrot.slane %v943, %v950
        %v953 = vunpack.c.l.s4 1983009808
        %v954 = vunpack.c.0.s8 %v953
        %v955 = vlaneseq
        %v956 = vshrl.u32 %v955, 7
        %v957 = vsub.s32 %v954, %v956
        %v958 = vrot.slane %v944, %v957
        %v959 = vcombine.low %v794, %v798
        %v960 = vcombine.high %v794, %v798
        %v962 = vunpack.c.l.s4 1983009808
        %v963 = vunpack.c.0.s8 %v962
        %v964 = vlaneseq
        %v965 = vshrl.u32 %v964, 7
        %v966 = vsub.s32 %v963, %v965
        %v967 = vrot.slane %v959, %v966
        %v969 = vunpack.c.l.s4 1983009808
        %v970 = vunpack.c.0.s8 %v969
        %v971 = vlaneseq
        %v972 = vshrl.u32 %v971, 7
        %v973 = vsub.s32 %v970, %v972
        %v974 = vrot.slane %v960, %v973
        %v975 = vcombine.low %v800, %v804
        %v976 = vcombine.high %v800, %v804
        %v978 = vunpack.c.l.s4 1983009808
        %v979 = vunpack.c.0.s8 %v978
        %v980 = vlaneseq
        %v981 = vshrl.u32 %v980, 7
        %v982 = vsub.s32 %v979, %v981
        %v983 = vrot.slane %v975, %v982
        %v985 = vunpack.c.l.s4 1983009808
        %v986 = vunpack.c.0.s8 %v985
        %v987 = vlaneseq
        %v988 = vshrl.u32 %v987, 7
        %v989 = vsub.s32 %v986, %v988
        %v990 = vrot.slane %v976, %v989
        %v991 = vcombine.low %v802, %v806
        %v992 = vcombine.high %v802, %v806
        %v994 = vunpack.c.l.s4 1983009808
        %v995 = vunpack.c.0.s8 %v994
        %v996 = vlaneseq
        %v997 = vshrl.u32 %v996, 7
        %v998 = vsub.s32 %v995, %v997
        %v999 = vrot.slane %v991, %v998
        %v1001 = vunpack.c.l.s4 1983009808
        %v1002 = vunpack.c.0.s8 %v1001
        %v1003 = vlaneseq
        %v1004 = vshrl.u32 %v1003, 7
        %v1005 = vsub.s32 %v1002, %v1004
        %v1006 = vrot.slane %v992, %v1005
        %v1007 = vcombine.low %v951, %v967
        %v1008 = vcombine.high %v951, %v967
        %v1010 = vunpack.c.l.s4 1934713408
        %v1011 = vunpack.c.0.s8 %v1010
        %v1012 = vlaneseq
        %v1013 = vshrl.u32 %v1012, 7
        %v1014 = vsub.s32 %v1011, %v1013
        %v1015 = vrot.slane %v1007, %v1014
        %v1017 = vunpack.c.l.s4 1934713408
        %v1018 = vunpack.c.0.s8 %v1017
        %v1019 = vlaneseq
        %v1020 = vshrl.u32 %v1019, 7
        %v1021 = vsub.s32 %v1018, %v1020
        %v1022 = vrot.slane %v1008, %v1021
        %v1023 = vcombine.low %v958, %v974
        %v1024 = vcombine.high %v958, %v974
        %v1026 = vunpack.c.l.s4 1934713408
        %v1027 = vunpack.c.0.s8 %v1026
        %v1028 = vlaneseq
        %v1029 = vshrl.u32 %v1028, 7
        %v1030 = vsub.s32 %v1027, %v1029
        %v1031 = vrot.slane %v1023, %v1030
        %v1033 = vunpack.c.l.s4 1934713408
        %v1034 = vunpack.c.0.s8 %v1033
        %v1035 = vlaneseq
        %v1036 = vshrl.u32 %v1035, 7
        %v1037 = vsub.s32 %v1034, %v1036
        %v1038 = vrot.slane %v1024, %v1037
        %v1039 = vcombine.low %v983, %v999
        %v1040 = vcombine.high %v983, %v999
        %v1042 = vunpack.c.l.s4 1934713408
        %v1043 = vunpack.c.0.s8 %v1042
        %v1044 = vlaneseq
        %v1045 = vshrl.u32 %v1044, 7
        %v1046 = vsub.s32 %v1043, %v1045
        %v1047 = vrot.slane %v1039, %v1046
        %v1049 = vunpack.c.l.s4 1934713408
        %v1050 = vunpack.c.0.s8 %v1049
        %v1051 = vlaneseq
        %v1052 = vshrl.u32 %v1051, 7
        %v1053 = vsub.s32 %v1050, %v1052
        %v1054 = vrot.slane %v1040, %v1053
        %v1055 = vcombine.low %v990, %v1006
        %v1056 = vcombine.high %v990, %v1006
        %v1058 = vunpack.c.l.s4 1934713408
        %v1059 = vunpack.c.0.s8 %v1058
        %v1060 = vlaneseq
        %v1061 = vshrl.u32 %v1060, 7
        %v1062 = vsub.s32 %v1059, %v1061
        %v1063 = vrot.slane %v1055, %v1062
        %v1065 = vunpack.c.l.s4 1934713408
        %v1066 = vunpack.c.0.s8 %v1065
        %v1067 = vlaneseq
        %v1068 = vshrl.u32 %v1067, 7
        %v1069 = vsub.s32 %v1066, %v1068
        %v1070 = vrot.slane %v1056, %v1069
        %v1071 = vcombine.low %v1015, %v1047
        %v1072 = vcombine.high %v1015, %v1047
        %v1073 = vcombine.low %v1022, %v1054
        %v1074 = vcombine.high %v1022, %v1054
        %v1075 = vcombine.low %v1031, %v1063
        %v1076 = vcombine.high %v1031, %v1063
        %v1077 = vcombine.low %v1038, %v1070
        %v1078 = vcombine.high %v1038, %v1070
        %1080 = vrot.lane.b32.xlu0 %v936, 16
        %v1081 = vpop.permute.xlu0 %1080
        %1084 = vrot.lane.b32.xlu0 %v937, 32
        %v1085 = vpop.permute.xlu0 %1084
        %1088 = vrot.lane.b32.xlu0 %v938, 48
        %v1089 = vpop.permute.xlu0 %1088
        %1092 = vrot.lane.b32.xlu0 %v939, 64
        %v1093 = vpop.permute.xlu0 %1092
        %1096 = vrot.lane.b32.xlu0 %v940, 80
        %v1097 = vpop.permute.xlu0 %1096
        %1100 = vrot.lane.b32.xlu0 %v941, 96
        %v1101 = vpop.permute.xlu0 %1100
        %1104 = vrot.lane.b32.xlu0 %v942, 112
        %v1105 = vpop.permute.xlu0 %1104
        %1108 = vrot.lane.b32.xlu0 %v1072, 16
        %v1109 = vpop.permute.xlu0 %1108
        %1112 = vrot.lane.b32.xlu0 %v1073, 32
        %v1113 = vpop.permute.xlu0 %1112
        %1116 = vrot.lane.b32.xlu0 %v1074, 48
        %v1117 = vpop.permute.xlu0 %1116
        %1120 = vrot.lane.b32.xlu0 %v1075, 64
        %v1121 = vpop.permute.xlu0 %1120
        %1124 = vrot.lane.b32.xlu0 %v1076, 80
        %v1125 = vpop.permute.xlu0 %1124
        %1128 = vrot.lane.b32.xlu0 %v1077, 96
        %v1129 = vpop.permute.xlu0 %1128
        %1132 = vrot.lane.b32.xlu0 %v1078, 112
        %v1133 = vpop.permute.xlu0 %1132
        %v1135 = vsel %vm285, %v935, %v1081
        %vm1136 = vcmask 261120
        %v1137 = vsel %vm1136, %v1135, %v1085
        %vm1138 = vcmask 392192
        %v1139 = vsel %vm1138, %v1137, %v1089
        %vm1140 = vcmask 523264
        %v1141 = vsel %vm1140, %v1139, %v1093
        %vm1142 = vcmask 654336
        %v1143 = vsel %vm1142, %v1141, %v1097
        %vm1144 = vcmask 785408
        %v1145 = vsel %vm1144, %v1143, %v1101
        %vm1146 = vcmask 916480
        %v1147 = vsel %vm1146, %v1145, %v1105
        %v1148 = vsel %vm285, %v1071, %v1109
        %v1149 = vsel %vm1136, %v1148, %v1113
        %v1150 = vsel %vm1138, %v1149, %v1117
        %v1151 = vsel %vm1140, %v1150, %v1121
        %v1152 = vsel %vm1142, %v1151, %v1125
        %v1153 = vsel %vm1144, %v1152, %v1129
        %v1154 = vsel %vm1146, %v1153, %v1133
        %1155 = vst [vmem:[%s177] sm:$0xff] %v1147
        %1156 = vst [vmem:[%s177 + $0x8] sm:$0xff] %v1154
        %s1157 = sand.u32 %s107, 1
        %s1158 = scalar_lea.sflag [#allocation4], %s1157
        %s1159 = sand.u32 %s107, 1
        %s1160 = smul.addr %s1159, 16
        %s1161 = scalar_lea.vmem [#allocation3], %s1160
        // Predicated region
        $region37: #{tpu_custom_call.1} parent=31 // pred_check
          %p1162 = pneg %p117
        $region38: #{tpu_custom_call.1} parent=31 // pred_check_branch
          %1164 = sbr.rel (%p1162) target = $region40
        $region39: #{tpu_custom_call.1} parent=31 // pred_region
          %s1165 = smul.u32 2, %s22
          %s1167 = ssub.s32 256, 256
          %1168 = vsyncadd %s1158, %s1167
          %s1169 = smul.addr %s21, 2
          %s1170 = sadd.s32 %s1165, %s1169
          %s1171 = smul.addr %s1170, 128
          %s1172 = scalar_lea.hbm %s3, %s1171
          %s1174 = sshll.u32 %s1161, 4
          %s1175 = int_to_ptr.vmem [resolvable:$true] %s1174
          %1177 = dma.vmem_to_hbm [thread:$0]  %s1175, 256, %s1172, %s1158
        $region40: #{tpu_custom_call.1} parent=31 // pred_fallthru
          _
      $region32: #{tpu_custom_call.1} parent=5 // pred_fallthru
        _
      %p1178 = scmp.le.s32.totalorder 2, %s12
      // Predicated region
      $region41: #{tpu_custom_call.1} parent=5 // pred_check
        %p1179 = pneg %p1178
      $region42: #{tpu_custom_call.1} parent=5 // pred_check_branch
        %1181 = sbr.rel (%p1179) target = $region44
      $region43: #{tpu_custom_call.1} parent=5 // pred_region
        %s1182 = ssub.s32 %s12, 2
        // Predicated region
        $region45: #{tpu_custom_call.1} parent=43 // pred_check
          %p1183 = pneg %p123
        $region46: #{tpu_custom_call.1} parent=43 // pred_check_branch
          %1185 = sbr.rel (%p1183) target = $region48
        $region47: #{tpu_custom_call.1} parent=43 // pred_region
          %s1186 = sand.u32 %s108, 1
          %s1187 = scalar_lea.sflag [#allocation4], %s1186
          %s1188 = sand.u32 %s108, 1
          %s1189 = smul.addr %s1188, 16
          %s1190 = scalar_lea.vmem [#allocation3], %s1189
          %1191 = dma.done %s1187, 256
        $region48: #{tpu_custom_call.1} parent=43 // pred_fallthru
          _
      $region44: #{tpu_custom_call.1} parent=5 // pred_fallthru
        _
    $region6: #{tpu_custom_call.1} parent=1 // loop_footer
      %s16 = sadd.s32 1, %s12
    $region7: #{tpu_custom_call.1} parent=1 // loop_footer_branch
      %11 = sbr.rel target = $region3
    $region8: #{tpu_custom_call.1} parent=1 // loop_exit
      _
    %1192 = vsyncpa [#allocation4], 1
    %s1193 = scalar_lea.sflag [#allocation4], 1
    %1194 = vsyncpa %s1193, 1

</llo_original>
